<compile_context>
chip_gen: v7x
topology: tpu7x:2x2x1
jax: 0.10.0
libtpu: 0.0.40
codegen_flags: <defaults>
</compile_context>

<pallas_src>
import jax
import jax.numpy as jnp
from jax.experimental import pallas as pl
from jax.experimental.pallas import tpu as pltpu


def _output_with_w_kernel(x_ref, lw_ref, w1_ref, w2_ref, b_ref, o_ref):
    # Linear on the fused concatenation: logits = x @ w1 + last_w @ w2 + b   (MXU, f32 accum)
    logits = jnp.dot(x_ref[...], w1_ref[...], preferred_element_type=jnp.float32)
    logits = logits + jnp.dot(lw_ref[...], w2_ref[...], preferred_element_type=jnp.float32)
    logits = logits + b_ref[...]
    # Numerically-stable softmax over the output-feature axis (torch dim=1).
    m = jnp.max(logits, axis=-1, keepdims=True)
    e = jnp.exp(logits - m)
    denom = jnp.sum(e, axis=-1, keepdims=True)
    # Exact division (not pl.reciprocal(approx=True)): this kernel is HBM-bound so the exact
    # divide is free, and every output row stays exactly on the probability simplex.
    o_ref[...] = (e / denom).astype(o_ref.dtype)


def _round_up(n, m):
    return ((n + m - 1) // m) * m


def _choose_batch_tile(B, tb, row_align):
    """Balanced batch tile selection.

    * >= 2 grid steps whenever B is large enough to split, so dimension_semantics=("parallel",)
      actually shards the batch grid across v7x's two TensorCores;
    * tiles are near-equal (cdiv into n tiles) instead of fixed-tb + tiny ragged tail, so no
      grid step is nearly empty;
    * tiles rounded up to row_align (8 for f32, 16 for bf16 sublane packing).
    """
    if B < 2 * row_align:
        return B                                   # too small to split: one full-array block
    max_tile = max(row_align, (tb // row_align) * row_align)
    n_tiles = max(2, pl.cdiv(B, max_tile))         # at least 2 steps -> both v7x TCs work
    return _round_up(pl.cdiv(B, n_tiles), row_align)


def prepare_fc_params(w, b, d_flat, *, x_dtype=jnp.bfloat16):
    """Split/transpose the torch-layout fc parameters ONCE (hoisted out of the per-step path).

    w: (d_out, d_flat + d_out) torch nn.Linear weight; b: (d_out,) bias.
    w1 (columns hitting the flattened conv features) is stored in x_dtype (default bf16) to
    match the streamed activations; w2 / bias stay f32 (tiny, feed f32 math directly).
    Returns w1 (d_flat, d_out), w2 (d_out, d_out), b2d (1, d_out).
    """
    d_out = w.shape[0]
    w1 = w[:, :d_flat].T.astype(x_dtype)
    w2 = w[:, d_flat:].T.astype(jnp.float32)
    b2d = b.reshape(1, d_out).astype(jnp.float32)
    return w1, w2, b2d


def output_with_w_prepared(x_nchw, last_w, w1, w2, b2d, *, tb=2048, vmem_limit_bytes=None):
    """Forward pass with pre-split fc params (see module docstring for the tiling rationale)."""
    B = x_nchw.shape[0]
    d_flat = x_nchw.shape[1] * x_nchw.shape[2] * x_nchw.shape[3]
    d_out = w1.shape[1]
    x_dtype = w1.dtype                       # streamed-activation dtype follows w1 (bf16 default)

    x_flat = x_nchw.reshape(B, d_flat).astype(x_dtype)
    last_w = last_w.astype(jnp.float32)

    x_itemsize = jnp.dtype(x_dtype).itemsize
    row_align = 16 if x_itemsize == 2 else 8          # bf16 packs 2 rows per sublane
    TB = _choose_batch_tile(B, tb, row_align)
    grid = (pl.cdiv(B, TB),)

    batched = lambda i: (i, 0)     # tiles marching over the batch axis (double-buffered stream)
    resident = lambda i: (0, 0)    # weights/bias: same block every step -> stay in VMEM
    single_buffer = pl.Buffered(1)  # constant-index operands don't need double buffering

    cost = pl.CostEstimate(
        flops=2 * B * (d_flat + d_out) * d_out,
        transcendentals=B * d_out,
        bytes_accessed=(B * d_flat * x_itemsize            # streamed x (dominant)
                        + 2 * B * d_out * 4                 # last_w in + softmax out
                        + d_flat * d_out * x_itemsize       # w1
                        + d_out * d_out * 4 + d_out * 4),   # w2 + bias
    )

    return pl.pallas_call(
        _output_with_w_kernel,
        out_shape=jax.ShapeDtypeStruct((B, d_out), jnp.float32),
        grid=grid,
        in_specs=[
            pl.BlockSpec((TB, d_flat), batched),                                   # x tile
            pl.BlockSpec((TB, d_out), batched),                                    # last_w tile
            pl.BlockSpec((d_flat, d_out), resident, pipeline_mode=single_buffer),  # w1 resident
            pl.BlockSpec((d_out, d_out), resident, pipeline_mode=single_buffer),   # w2 resident
            pl.BlockSpec((1, d_out), resident, pipeline_mode=single_buffer),       # bias resident
        ],
        # Full 17-wide rows: do NOT pad d_out to 128 (would only add HBM write traffic).
        out_specs=pl.BlockSpec((TB, d_out), batched),
        compiler_params=pltpu.CompilerParams(
            dimension_semantics=("parallel",),   # megacore-shards the batch grid on v7x
            vmem_limit_bytes=vmem_limit_bytes,
        ),
        cost_estimate=cost,
    )(x_flat, last_w, w1, w2, b2d)


def output_with_w(x_nchw, last_w, w, b, *, x_dtype=jnp.bfloat16, tb=2048, vmem_limit_bytes=None):
    """Convenience wrapper taking the raw torch-layout fc weight/bias.

    Prefer output_with_w_prepared() in training/inference loops so the weight split/transpose
    is done once at parameter-load time.
    """
    d_flat = x_nchw.shape[1] * x_nchw.shape[2] * x_nchw.shape[3]
    w1, w2, b2d = prepare_fc_params(w, b, d_flat, x_dtype=x_dtype)
    return output_with_w_prepared(x_nchw, last_w, w1, w2, b2d, tb=tb,
                                  vmem_limit_bytes=vmem_limit_bytes)


if __name__ == "__main__":
    # Small shapes consistent with the module: shape = (B, F, C, W)
    B, F, C, W = 2, 4, 16, 8
    d_flat = F * C * W               # 512
    d_in = d_flat + C + 1            # 529
    d_out = C + 1                    # 17

    key = jax.random.PRNGKey(0)
    k_x, k_lw, k_w, k_b = jax.random.split(key, 4)

    x = jax.random.normal(k_x, (B, F, C, W), dtype=jnp.float32)
    last_w_raw = jax.random.uniform(k_lw, (B, C + 1), dtype=jnp.float32)
    last_w = last_w_raw / jnp.sum(last_w_raw, axis=1, keepdims=True)  # portfolio-like weights

    # Deterministic fc parameters (torch nn.Linear layout: weight (out, in), bias (out,))
    bound = 1.0 / jnp.sqrt(jnp.float32(d_in))
    fc_w = jax.random.uniform(k_w, (d_out, d_in), minval=-bound, maxval=bound, dtype=jnp.float32)
    fc_b = jax.random.uniform(k_b, (d_out,), minval=-bound, maxval=bound, dtype=jnp.float32)

    # Hoist the weight split/transpose (done once; in a real agent this lives at param-load time).
    w1, w2, b2d = prepare_fc_params(fc_w, fc_b, d_flat)   # bf16 w1 by default
    fwd = jax.jit(output_with_w_prepared)

    out = jax.block_until_ready(fwd(x, last_w, w1, w2, b2d))

    # Pure-JAX f32 reference of the exact PyTorch semantics.
    cat = jnp.concatenate([x.reshape(B, -1), last_w], axis=1)
    ref = jax.nn.softmax(cat @ fc_w.T + fc_b, axis=1)
    # 2e-3 tolerance: x/w1 are streamed in bf16 (input rounding only; dots accumulate in f32).
    assert jnp.allclose(out, ref, atol=2e-3, rtol=2e-3), "mismatch vs reference"
    # Exact division in the kernel -> rows sum to 1 to f32 precision.
    assert jnp.allclose(jnp.sum(out, axis=1), 1.0, atol=1e-5), "softmax rows must sum to 1"

    # Also exercise the multi-step, balanced-tile path (grid > 1, ragged last block).
    B2 = 100
    k_x2, k_lw2 = jax.random.split(jax.random.PRNGKey(1), 2)
    x2 = jax.random.normal(k_x2, (B2, F, C, W), dtype=jnp.float32)
    lw2_raw = jax.random.uniform(k_lw2, (B2, C + 1), dtype=jnp.float32)
    lw2 = lw2_raw / jnp.sum(lw2_raw, axis=1, keepdims=True)

    out2 = jax.block_until_ready(fwd(x2, lw2, w1, w2, b2d))
    cat2 = jnp.concatenate([x2.reshape(B2, -1), lw2], axis=1)
    ref2 = jax.nn.softmax(cat2 @ fc_w.T + fc_b, axis=1)
    assert jnp.allclose(out2, ref2, atol=2e-3, rtol=2e-3), "mismatch vs reference (tiled)"
    assert jnp.allclose(jnp.sum(out2, axis=1), 1.0, atol=1e-5), "softmax rows must sum to 1 (tiled)"

    print("KERNEL_OK")
</pallas_src>

<mosaic_0001>
module attributes {stable_mosaic.version = 11 : i64} {
  func.func @_output_with_w_kernel(%arg0: i32, %arg1: memref<2x512xbf16, #tpu.memory_space<vmem>>, %arg2: memref<2x17xf32, #tpu.memory_space<vmem>>, %arg3: memref<512x17xbf16, #tpu.memory_space<vmem>>, %arg4: memref<17x17xf32, #tpu.memory_space<vmem>>, %arg5: memref<1x17xf32, #tpu.memory_space<vmem>>, %arg6: memref<2x17xf32, #tpu.memory_space<vmem>>) attributes {dimension_semantics = [#tpu.dimension_semantics<parallel>], iteration_bounds = array<i64: 1>, scalar_prefetch = 0 : i64, scratch_operands = 0 : i64, tpu.core_type = #tpu.core_type<tc>, window_params = [{transform_indices = @transform_0, window_bounds = array<i64: 2, 512>}, {transform_indices = @transform_1, window_bounds = array<i64: 2, 17>}, {pipeline_mode = #tpu.pipeline_mode<synchronous>, transform_indices = @transform_2, window_bounds = array<i64: 512, 17>}, {pipeline_mode = #tpu.pipeline_mode<synchronous>, transform_indices = @transform_3, window_bounds = array<i64: 17, 17>}, {pipeline_mode = #tpu.pipeline_mode<synchronous>, transform_indices = @transform_4, window_bounds = array<i64: 1, 17>}, {transform_indices = @transform_5, window_bounds = array<i64: 2, 17>}]} {
    %c0 = arith.constant 0 : index
    %c0_0 = arith.constant 0 : index
    %0 = vector.load %arg1[%c0, %c0_0] : memref<2x512xbf16, #tpu.memory_space<vmem>>, vector<2x512xbf16>
    %c0_1 = arith.constant 0 : index
    %c0_2 = arith.constant 0 : index
    %1 = vector.load %arg3[%c0_1, %c0_2] : memref<512x17xbf16, #tpu.memory_space<vmem>>, vector<512x17xbf16>
    %cst = arith.constant dense<0.000000e+00> : vector<2x17xf32>
    %2 = tpu.matmul %0, %1, %cst {dimension_numbers = #tpu.dot_dimension_numbers<[1], [0], [0], [1], [0, 0, 1, 1], [], []>} : vector<2x512xbf16>, vector<512x17xbf16>, vector<2x17xf32> -> vector<2x17xf32>
    %c0_3 = arith.constant 0 : index
    %c0_4 = arith.constant 0 : index
    %3 = vector.load %arg2[%c0_3, %c0_4] : memref<2x17xf32, #tpu.memory_space<vmem>>, vector<2x17xf32>
    %c0_5 = arith.constant 0 : index
    %c0_6 = arith.constant 0 : index
    %4 = vector.load %arg4[%c0_5, %c0_6] : memref<17x17xf32, #tpu.memory_space<vmem>>, vector<17x17xf32>
    %cst_7 = arith.constant dense<0.000000e+00> : vector<2x17xf32>
    %5 = tpu.matmul %3, %4, %cst_7 {dimension_numbers = #tpu.dot_dimension_numbers<[1], [0], [0], [1], [0, 0, 1, 1], [], []>} : vector<2x17xf32>, vector<17x17xf32>, vector<2x17xf32> -> vector<2x17xf32>
    %6 = arith.addf %2, %5 : vector<2x17xf32>
    %c0_8 = arith.constant 0 : index
    %c0_9 = arith.constant 0 : index
    %7 = vector.load %arg5[%c0_8, %c0_9] : memref<1x17xf32, #tpu.memory_space<vmem>>, vector<1x17xf32>
    %8 = vector.broadcast %7 : vector<1x17xf32> to vector<2x17xf32>
    %9 = arith.addf %6, %8 : vector<2x17xf32>
    %cst_10 = arith.constant dense<0xFF800000> : vector<2xf32>
    %10 = vector.multi_reduction <maximumf>, %9, %cst_10 [1] : vector<2x17xf32> to vector<2xf32>
    %11 = vector.shape_cast %10 : vector<2xf32> to vector<2x1xf32>
    %12 = vector.broadcast %11 : vector<2x1xf32> to vector<2x17xf32>
    %13 = arith.subf %9, %12 : vector<2x17xf32>
    %14 = math.exp %13 : vector<2x17xf32>
    %cst_11 = arith.constant dense<0.000000e+00> : vector<2xf32>
    %15 = vector.multi_reduction <add>, %14, %cst_11 [1] : vector<2x17xf32> to vector<2xf32>
    %16 = vector.shape_cast %15 : vector<2xf32> to vector<2x1xf32>
    %17 = vector.broadcast %16 : vector<2x1xf32> to vector<2x17xf32>
    %18 = arith.divf %14, %17 : vector<2x17xf32>
    %c0_12 = arith.constant 0 : index
    %c0_13 = arith.constant 0 : index
    %19 = vector.load %arg6[%c0_12, %c0_13] : memref<2x17xf32, #tpu.memory_space<vmem>>, vector<2x17xf32>
    tpu.vector_store %arg6[%c0_12, %c0_13], %18 {strides = array<i32>} : memref<2x17xf32, #tpu.memory_space<vmem>>, vector<2x17xf32>,
    return
  }
  func.func @transform_0(%arg0: i32) -> (i32, i32) {
    %c0_i32 = arith.constant 0 : i32
    %c0_i32_0 = arith.constant 0 : i32
    return %arg0, %c0_i32 : i32, i32
  }
  func.func @transform_1(%arg0: i32) -> (i32, i32) {
    %c0_i32 = arith.constant 0 : i32
    %c0_i32_0 = arith.constant 0 : i32
    return %arg0, %c0_i32 : i32, i32
  }
  func.func @transform_2(%arg0: i32) -> (i32, i32) {
    %c0_i32 = arith.constant 0 : i32
    %c0_i32_0 = arith.constant 0 : i32
    %c0_i32_1 = arith.constant 0 : i32
    return %c0_i32, %c0_i32_0 : i32, i32
  }
  func.func @transform_3(%arg0: i32) -> (i32, i32) {
    %c0_i32 = arith.constant 0 : i32
    %c0_i32_0 = arith.constant 0 : i32
    %c0_i32_1 = arith.constant 0 : i32
    return %c0_i32, %c0_i32_0 : i32, i32
  }
  func.func @transform_4(%arg0: i32) -> (i32, i32) {
    %c0_i32 = arith.constant 0 : i32
    %c0_i32_0 = arith.constant 0 : i32
    %c0_i32_1 = arith.constant 0 : i32
    return %c0_i32, %c0_i32_0 : i32, i32
  }
  func.func @transform_5(%arg0: i32) -> (i32, i32) {
    %c0_i32 = arith.constant 0 : i32
    %c0_i32_0 = arith.constant 0 : i32
    return %arg0, %c0_i32 : i32, i32
  }
}

</mosaic_0001>

<llo_original>
// kernel: output_with_w_prepared.1
$region0: #{output_with_w_prepared.1}
  #allocation0 [shape = 'u32[]', space=smem, size = 0x4, offset = 0x4, fixed_abs, tag = 'smem constant byte address 0x4 - core index']
  #allocation1 [shape = 'u32[144,128]{1,0:T(1,128)}', space=vmem, size = 0x12000, scoped, tag = 'internal scratch']
  %s0 = inlined_call_operand.vmem [shape: bf16[2,512], index: 0, kind: input, shape index: {}]
  %s1 = inlined_call_operand.vmem [shape: f32[2,17], index: 1, kind: input, shape index: {}]
  %s2 = inlined_call_operand.vmem [shape: bf16[512,17], index: 2, kind: input, shape index: {}]
  %s3 = inlined_call_operand.vmem [shape: f32[17,17], index: 3, kind: input, shape index: {}]
  %s4 = inlined_call_operand.vmem [shape: f32[1,17], index: 4, kind: input, shape index: {}]
  %s5 = inlined_call_operand.hbm [shape: f32[2,17], index: 5, kind: output, shape index: {}]
  %s6 = sld [smem:[#allocation0]]
  $region30: #{output_with_w_prepared.1} parent=0
    _
  %s8 = ssub.s32 1, %s6
  %s9 = scalar_select 0, %s8, %s6
  $region1: #{output_with_w_prepared.1} parent=0
    #allocation2 [shape = 'u8[1024]{0}', space=vmem, size = 0x400, scoped, tag = 'output window, operand 0, single buffered']
    #allocation3 [shape = 's32[1]{0}', space=sflag, size = 0x4, scoped, tag = 'scoped memory for output_with_w_prepared.1']
    %10 = vsyncpa [#allocation3], 0
    // Predicated region
    $region2: #{output_with_w_prepared.1} parent=1 // pred_check
      _
    $region3: #{output_with_w_prepared.1} parent=1 // pred_check_branch
      %12 = sbr.rel (0) target = $region5
    $region4: #{output_with_w_prepared.1} parent=1 // pred_region
      _
    $region5: #{output_with_w_prepared.1} parent=1 // pred_fallthru
      _
    // Predicated region
    $region6: #{output_with_w_prepared.1} parent=1 // pred_check
      _
    $region7: #{output_with_w_prepared.1} parent=1 // pred_check_branch
      %14 = sbr.rel (0) target = $region9
    $region8: #{output_with_w_prepared.1} parent=1 // pred_region
      _
    $region9: #{output_with_w_prepared.1} parent=1 // pred_fallthru
      _
    // Predicated region
    $region10: #{output_with_w_prepared.1} parent=1 // pred_check
      _
    $region11: #{output_with_w_prepared.1} parent=1 // pred_check_branch
      %16 = sbr.rel (0) target = $region13
    $region12: #{output_with_w_prepared.1} parent=1 // pred_region
      _
    $region13: #{output_with_w_prepared.1} parent=1 // pred_fallthru
      _
    // Predicated region
    $region14: #{output_with_w_prepared.1} parent=1 // pred_check
      _
    $region15: #{output_with_w_prepared.1} parent=1 // pred_check_branch
      %18 = sbr.rel (0) target = $region17
    $region16: #{output_with_w_prepared.1} parent=1 // pred_region
      _
    $region17: #{output_with_w_prepared.1} parent=1 // pred_fallthru
      _
    // Predicated region
    $region18: #{output_with_w_prepared.1} parent=1 // pred_check
      _
    $region19: #{output_with_w_prepared.1} parent=1 // pred_check_branch
      %20 = sbr.rel (0) target = $region21
    $region20: #{output_with_w_prepared.1} parent=1 // pred_region
      _
    $region21: #{output_with_w_prepared.1} parent=1 // pred_fallthru
      _
    %v22 = vld [vmem:[%s0] sm:$0xf]
    %v23 = vld [vmem:[%s2] sm:$0xf]
    %v24 = vld [vmem:[%s2 + $0x4] sm:$0xf]
    %v25 = vld [vmem:[%s2 + $0x8] sm:$0xf]
    %v26 = vld [vmem:[%s2 + $0xc] sm:$0xf]
    %v27 = vld [vmem:[%s2 + $0x10] sm:$0xf]
    %v28 = vld [vmem:[%s2 + $0x14] sm:$0xf]
    %v29 = vld [vmem:[%s2 + $0x18] sm:$0xf]
    %v30 = vld [vmem:[%s2 + $0x1c] sm:$0xf]
    %v31 = vld [vmem:[%s2 + $0x20] sm:$0xf]
    %v32 = vld [vmem:[%s2 + $0x24] sm:$0xf]
    %v33 = vld [vmem:[%s2 + $0x28] sm:$0xf]
    %v34 = vld [vmem:[%s2 + $0x2c] sm:$0xf]
    %v35 = vld [vmem:[%s2 + $0x30] sm:$0xf]
    %v36 = vld [vmem:[%s2 + $0x34] sm:$0xf]
    %v37 = vld [vmem:[%s2 + $0x38] sm:$0xf]
    %v38 = vld [vmem:[%s2 + $0x3c] sm:$0xf]
    %v39 = vld [vmem:[%s2 + $0x40] sm:$0xf]
    %v40 = vld [vmem:[%s2 + $0x44] sm:$0xf]
    %v41 = vld [vmem:[%s2 + $0x48] sm:$0xf]
    %v42 = vld [vmem:[%s2 + $0x4c] sm:$0xf]
    %v43 = vld [vmem:[%s2 + $0x50] sm:$0xf]
    %v44 = vld [vmem:[%s2 + $0x54] sm:$0xf]
    %v45 = vld [vmem:[%s2 + $0x58] sm:$0xf]
    %v46 = vld [vmem:[%s2 + $0x5c] sm:$0xf]
    %v47 = vld [vmem:[%s2 + $0x60] sm:$0xf]
    %v48 = vld [vmem:[%s2 + $0x64] sm:$0xf]
    %v49 = vld [vmem:[%s2 + $0x68] sm:$0xf]
    %v50 = vld [vmem:[%s2 + $0x6c] sm:$0xf]
    %v51 = vld [vmem:[%s2 + $0x70] sm:$0xf]
    %v52 = vld [vmem:[%s2 + $0x74] sm:$0xf]
    %v53 = vld [vmem:[%s2 + $0x78] sm:$0xf]
    %v54 = vld [vmem:[%s2 + $0x7c] sm:$0xf]
    %v55 = vld [vmem:[%s2 + $0x80] sm:$0xf]
    %v56 = vld [vmem:[%s2 + $0x84] sm:$0xf]
    %v57 = vld [vmem:[%s2 + $0x88] sm:$0xf]
    %v58 = vld [vmem:[%s2 + $0x8c] sm:$0xf]
    %v59 = vld [vmem:[%s2 + $0x90] sm:$0xf]
    %v60 = vld [vmem:[%s2 + $0x94] sm:$0xf]
    %v61 = vld [vmem:[%s2 + $0x98] sm:$0xf]
    %v62 = vld [vmem:[%s2 + $0x9c] sm:$0xf]
    %v63 = vld [vmem:[%s2 + $0xa0] sm:$0xf]
    %v64 = vld [vmem:[%s2 + $0xa4] sm:$0xf]
    %v65 = vld [vmem:[%s2 + $0xa8] sm:$0xf]
    %v66 = vld [vmem:[%s2 + $0xac] sm:$0xf]
    %v67 = vld [vmem:[%s2 + $0xb0] sm:$0xf]
    %v68 = vld [vmem:[%s2 + $0xb4] sm:$0xf]
    %v69 = vld [vmem:[%s2 + $0xb8] sm:$0xf]
    %v70 = vld [vmem:[%s2 + $0xbc] sm:$0xf]
    %v71 = vld [vmem:[%s2 + $0xc0] sm:$0xf]
    %v72 = vld [vmem:[%s2 + $0xc4] sm:$0xf]
    %v73 = vld [vmem:[%s2 + $0xc8] sm:$0xf]
    %v74 = vld [vmem:[%s2 + $0xcc] sm:$0xf]
    %v75 = vld [vmem:[%s2 + $0xd0] sm:$0xf]
    %v76 = vld [vmem:[%s2 + $0xd4] sm:$0xf]
    %v77 = vld [vmem:[%s2 + $0xd8] sm:$0xf]
    %v78 = vld [vmem:[%s2 + $0xdc] sm:$0xf]
    %v79 = vld [vmem:[%s2 + $0xe0] sm:$0xf]
    %v80 = vld [vmem:[%s2 + $0xe4] sm:$0xf]
    %v81 = vld [vmem:[%s2 + $0xe8] sm:$0xf]
    %v82 = vld [vmem:[%s2 + $0xec] sm:$0xf]
    %v83 = vld [vmem:[%s2 + $0xf0] sm:$0xf]
    %v84 = vld [vmem:[%s2 + $0xf4] sm:$0xf]
    %v85 = vld [vmem:[%s2 + $0xf8] sm:$0xf]
    %v86 = vld [vmem:[%s2 + $0xfc] sm:$0xf]
    %v87 = vld [vmem:[%s1] sm:$0x3]
    %v88 = vld [vmem:[%s3] sm:$0xff]
    %v89 = vld [vmem:[%s3 + $0x8] sm:$0xff]
    %v90 = vld [vmem:[%s3 + $0x10] sm:$0x1]
    %vm91 = vcmask 138240
    %v93 = vsel %vm91, %v87, 0
    %vm95 = vcmask 1040384
    %v97 = vsel %vm95, %v90, 0
    %99 = vmatprep.subr.mxu0 0.0
    %100 = vmatpush1.msra.mxu0 %v88
    %101 = vmatprep.subr.mxu0 0.0
    %102 = vmatpush1.msra.mxu0 %v89
    %103 = vmatprep.subr.mxu0 0.0
    %104 = vmatpush1.msra.mxu0 %v97
    %105 = vmatprep.subr.mxu0 0.0
    %106 = vmatpush1.msra.mxu0 0.0
    %107 = vmatprep.subr.mxu0 0.0
    %108 = vmatpush1.msra.mxu0 0.0
    %109 = vmatprep.subr.mxu0 0.0
    %110 = vmatpush1.msra.mxu0 0.0
    %111 = vmatprep.subr.mxu0 0.0
    %112 = vmatpush1.msra.mxu0 0.0
    %113 = vmatprep.subr.mxu0 0.0
    %114 = vmatpush1.msra.mxu0 0.0
    %115 = vmatprep.subr.mxu0 0.0
    %116 = vmatpush1.msra.mxu0 0.0
    %117 = vmatprep.subr.mxu0 0.0
    %118 = vmatpush1.msra.mxu0 0.0
    %119 = vmatprep.subr.mxu0 0.0
    %120 = vmatpush1.msra.mxu0 0.0
    %121 = vmatprep.subr.mxu0 0.0
    %122 = vmatpush1.msra.mxu0 0.0
    %123 = vmatprep.subr.mxu0 0.0
    %124 = vmatpush1.msra.mxu0 0.0
    %125 = vmatprep.subr.mxu0 0.0
    %126 = vmatpush1.msra.mxu0 0.0
    %127 = vmatprep.subr.mxu0 0.0
    %128 = vmatpush1.msra.mxu0 0.0
    %129 = vmatprep.subr.mxu0 0.0
    %130 = vmatpush1.msra.mxu0 0.0
    %131 = vmatprep.subr.mxu0 0.0
    %132 = vmatpush1.msra.mxu0 0.0
    %133 = vmatprep.subr.mxu0 0.0
    %134 = vmatpush1.msra.mxu0 0.0
    %135 = vmatprep.subr.mxu0 0.0
    %136 = vmatpush1.msra.mxu0 0.0
    %137 = vmatprep.subr.mxu0 0.0
    %138 = vmatpush1.msra.mxu0 0.0
    %139 = vmatprep.subr.mxu0 0.0
    %140 = vmatpush1.msra.mxu0 0.0
    %141 = vmatprep.subr.mxu0 0.0
    %142 = vmatpush1.msra.mxu0 0.0
    %143 = vmatprep.subr.mxu0 0.0
    %144 = vmatpush1.msra.mxu0 0.0
    %145 = vmatprep.subr.mxu0 0.0
    %146 = vmatpush1.msra.mxu0 0.0
    %147 = vmatprep.subr.mxu0 0.0
    %148 = vmatpush1.msra.mxu0 0.0
    %149 = vmatprep.subr.mxu0 0.0
    %150 = vmatpush1.msra.mxu0 0.0
    %151 = vmatprep.subr.mxu0 0.0
    %152 = vmatpush1.msra.mxu0 0.0
    %153 = vmatprep.subr.mxu0 0.0
    %154 = vmatpush1.msra.mxu0 0.0
    %155 = vmatprep.subr.mxu0 0.0
    %156 = vmatpush1.msra.mxu0 0.0
    %157 = vmatprep.subr.mxu0 0.0
    %158 = vmatpush1.msra.mxu0 0.0
    %159 = vmatprep.subr.mxu0 0.0
    %160 = vmatpush1.msra.mxu0 0.0
    %161 = vmatprep.subr.mxu0 0.0
    %162 = vmatpush1.msra.mxu0 0.0
    %163 = vmatprep.mubr.f32.mxu0 0.0
    %164 = vmatmul.mubr.f32.gmra.mrb[0].mxu0 %v93
    %v165 = vpop.f32.mrb[0].mxu0
    %v166 = vadd.f32 0.0, %v165
    %v167 = vpop.f32.mrb[0].mxu0
    %168 = vdwg.mxu0
    %v171 = vunpack.c.l.s4 1966171168
    %v172 = vunpack.c.0.s8 %v171
    %v173 = vlaneseq
    %v174 = vshrl.u32 %v173, 7
    %v175 = vsub.s32 %v172, %v174
    %v176 = vrot.slane %v22, %v175
    %v177 = vcombine.high %v176, %v176
    %v179 = vunpack.c.l.s4 1966171168
    %v180 = vunpack.c.0.s8 %v179
    %v181 = vlaneseq
    %v182 = vshrl.u32 %v181, 7
    %v183 = vsub.s32 %v180, %v182
    %v184 = vrot.slane %v176, %v183
    %v186 = vunpack.c.l.s4 1966171168
    %v187 = vunpack.c.0.s8 %v186
    %v188 = vlaneseq
    %v189 = vshrl.u32 %v188, 7
    %v190 = vsub.s32 %v187, %v189
    %v191 = vrot.slane %v177, %v190
    %v192 = vcombine.high %v184, %v184
    %v193 = vcombine.high %v191, %v191
    %v262 = vunpack.c.l.b16 %v23
    %v263 = vunpack.c.l.b16 %v24
    %v264 = vunpack.c.l.b16 %v25
    %v265 = vunpack.c.l.b16 %v26
    %v266 = vunpack.c.l.b16 %v27
    %v267 = vunpack.c.l.b16 %v28
    %v268 = vunpack.c.l.b16 %v29
    %v269 = vunpack.c.l.b16 %v30
    %v270 = vunpack.c.l.b16 %v31
    %v271 = vunpack.c.l.b16 %v32
    %v272 = vunpack.c.l.b16 %v33
    %v273 = vunpack.c.l.b16 %v34
    %v274 = vunpack.c.l.b16 %v35
    %v275 = vunpack.c.l.b16 %v36
    %v276 = vunpack.c.l.b16 %v37
    %v277 = vunpack.c.l.b16 %v38
    %v278 = vunpack.c.l.b16 %v39
    %v279 = vunpack.c.l.b16 %v40
    %v280 = vunpack.c.l.b16 %v41
    %v281 = vunpack.c.l.b16 %v42
    %v282 = vunpack.c.l.b16 %v43
    %v283 = vunpack.c.l.b16 %v44
    %v284 = vunpack.c.l.b16 %v45
    %v285 = vunpack.c.l.b16 %v46
    %v286 = vunpack.c.l.b16 %v47
    %v287 = vunpack.c.l.b16 %v48
    %v288 = vunpack.c.l.b16 %v49
    %v289 = vunpack.c.l.b16 %v50
    %v290 = vunpack.c.l.b16 %v51
    %v291 = vunpack.c.l.b16 %v52
    %v292 = vunpack.c.l.b16 %v53
    %v293 = vunpack.c.l.b16 %v54
    %v294 = vunpack.c.l.b16 %v55
    %v295 = vunpack.c.l.b16 %v56
    %v296 = vunpack.c.l.b16 %v57
    %v297 = vunpack.c.l.b16 %v58
    %v298 = vunpack.c.l.b16 %v59
    %v299 = vunpack.c.l.b16 %v60
    %v300 = vunpack.c.l.b16 %v61
    %v301 = vunpack.c.l.b16 %v62
    %v302 = vunpack.c.l.b16 %v63
    %v303 = vunpack.c.l.b16 %v64
    %v304 = vunpack.c.l.b16 %v65
    %v305 = vunpack.c.l.b16 %v66
    %v306 = vunpack.c.l.b16 %v67
    %v307 = vunpack.c.l.b16 %v68
    %v308 = vunpack.c.l.b16 %v69
    %v309 = vunpack.c.l.b16 %v70
    %v310 = vunpack.c.l.b16 %v71
    %v311 = vunpack.c.l.b16 %v72
    %v312 = vunpack.c.l.b16 %v73
    %v313 = vunpack.c.l.b16 %v74
    %v314 = vunpack.c.l.b16 %v75
    %v315 = vunpack.c.l.b16 %v76
    %v316 = vunpack.c.l.b16 %v77
    %v317 = vunpack.c.l.b16 %v78
    %v318 = vunpack.c.l.b16 %v79
    %v319 = vunpack.c.l.b16 %v80
    %v320 = vunpack.c.l.b16 %v81
    %v321 = vunpack.c.l.b16 %v82
    %v322 = vunpack.c.l.b16 %v83
    %v323 = vunpack.c.l.b16 %v84
    %v324 = vunpack.c.l.b16 %v85
    %v325 = vunpack.c.l.b16 %v86
    %v326 = vpack.c.b16 %v263, %v262
    %v327 = vpack.c.b16 %v265, %v264
    %v328 = vpack.c.b16 %v267, %v266
    %v329 = vpack.c.b16 %v269, %v268
    %v330 = vpack.c.b16 %v271, %v270
    %v331 = vpack.c.b16 %v273, %v272
    %v332 = vpack.c.b16 %v275, %v274
    %v333 = vpack.c.b16 %v277, %v276
    %v334 = vpack.c.b16 %v279, %v278
    %v335 = vpack.c.b16 %v281, %v280
    %v336 = vpack.c.b16 %v283, %v282
    %v337 = vpack.c.b16 %v285, %v284
    %v338 = vpack.c.b16 %v287, %v286
    %v339 = vpack.c.b16 %v289, %v288
    %v340 = vpack.c.b16 %v291, %v290
    %v341 = vpack.c.b16 %v293, %v292
    %v342 = vpack.c.b16 %v295, %v294
    %v343 = vpack.c.b16 %v297, %v296
    %v344 = vpack.c.b16 %v299, %v298
    %v345 = vpack.c.b16 %v301, %v300
    %v346 = vpack.c.b16 %v303, %v302
    %v347 = vpack.c.b16 %v305, %v304
    %v348 = vpack.c.b16 %v307, %v306
    %v349 = vpack.c.b16 %v309, %v308
    %v350 = vpack.c.b16 %v311, %v310
    %v351 = vpack.c.b16 %v313, %v312
    %v352 = vpack.c.b16 %v315, %v314
    %v353 = vpack.c.b16 %v317, %v316
    %v354 = vpack.c.b16 %v319, %v318
    %v355 = vpack.c.b16 %v321, %v320
    %v356 = vpack.c.b16 %v323, %v322
    %v357 = vpack.c.b16 %v325, %v324
    %390 = vmatprep.subr.bf16.mxu0 0
    %391 = vmatpush1.bf16.msra.mxu0 %v326
    %392 = vmatprep.subr.bf16.mxu0 0
    %393 = vmatpush1.bf16.msra.mxu0 %v327
    %394 = vmatprep.subr.bf16.mxu0 0
    %395 = vmatpush1.bf16.msra.mxu0 %v328
    %396 = vmatprep.subr.bf16.mxu0 0
    %397 = vmatpush1.bf16.msra.mxu0 %v329
    %398 = vmatprep.subr.bf16.mxu0 0
    %399 = vmatpush1.bf16.msra.mxu0 %v330
    %400 = vmatprep.subr.bf16.mxu0 0
    %401 = vmatpush1.bf16.msra.mxu0 %v331
    %402 = vmatprep.subr.bf16.mxu0 0
    %403 = vmatpush1.bf16.msra.mxu0 %v332
    %404 = vmatprep.subr.bf16.mxu0 0
    %405 = vmatpush1.bf16.msra.mxu0 %v333
    %406 = vmatprep.subr.bf16.mxu0 0
    %407 = vmatpush1.bf16.msra.mxu0 %v334
    %408 = vmatprep.subr.bf16.mxu0 0
    %409 = vmatpush1.bf16.msra.mxu0 %v335
    %410 = vmatprep.subr.bf16.mxu0 0
    %411 = vmatpush1.bf16.msra.mxu0 %v336
    %412 = vmatprep.subr.bf16.mxu0 0
    %413 = vmatpush1.bf16.msra.mxu0 %v337
    %414 = vmatprep.subr.bf16.mxu0 0
    %415 = vmatpush1.bf16.msra.mxu0 %v338
    %416 = vmatprep.subr.bf16.mxu0 0
    %417 = vmatpush1.bf16.msra.mxu0 %v339
    %418 = vmatprep.subr.bf16.mxu0 0
    %419 = vmatpush1.bf16.msra.mxu0 %v340
    %420 = vmatprep.subr.bf16.mxu0 0
    %421 = vmatpush1.bf16.msra.mxu0 %v341
    %422 = vmatprep.mubr.bf16.mxu0 %v191
    %423 = vmatmul.mubr.bf16.gmra.mrb[0].mxu0 %v184
    %v424 = vpop.f32.mrb[0].mxu0
    %v425 = vadd.f32 %v166, %v424
    %v426 = vpop.f32.mrb[0].mxu0
    %v427 = vpop.f32.mrb[0].mxu0
    %v428 = vpop.f32.mrb[0].mxu0
    %429 = vdwg.mxu0
    %430 = vmatprep.subr.bf16.mxu0 0
    %431 = vmatpush1.bf16.msra.mxu0 %v342
    %432 = vmatprep.subr.bf16.mxu0 0
    %433 = vmatpush1.bf16.msra.mxu0 %v343
    %434 = vmatprep.subr.bf16.mxu0 0
    %435 = vmatpush1.bf16.msra.mxu0 %v344
    %436 = vmatprep.subr.bf16.mxu0 0
    %437 = vmatpush1.bf16.msra.mxu0 %v345
    %438 = vmatprep.subr.bf16.mxu0 0
    %439 = vmatpush1.bf16.msra.mxu0 %v346
    %440 = vmatprep.subr.bf16.mxu0 0
    %441 = vmatpush1.bf16.msra.mxu0 %v347
    %442 = vmatprep.subr.bf16.mxu0 0
    %443 = vmatpush1.bf16.msra.mxu0 %v348
    %444 = vmatprep.subr.bf16.mxu0 0
    %445 = vmatpush1.bf16.msra.mxu0 %v349
    %446 = vmatprep.subr.bf16.mxu0 0
    %447 = vmatpush1.bf16.msra.mxu0 %v350
    %448 = vmatprep.subr.bf16.mxu0 0
    %449 = vmatpush1.bf16.msra.mxu0 %v351
    %450 = vmatprep.subr.bf16.mxu0 0
    %451 = vmatpush1.bf16.msra.mxu0 %v352
    %452 = vmatprep.subr.bf16.mxu0 0
    %453 = vmatpush1.bf16.msra.mxu0 %v353
    %454 = vmatprep.subr.bf16.mxu0 0
    %455 = vmatpush1.bf16.msra.mxu0 %v354
    %456 = vmatprep.subr.bf16.mxu0 0
    %457 = vmatpush1.bf16.msra.mxu0 %v355
    %458 = vmatprep.subr.bf16.mxu0 0
    %459 = vmatpush1.bf16.msra.mxu0 %v356
    %460 = vmatprep.subr.bf16.mxu0 0
    %461 = vmatpush1.bf16.msra.mxu0 %v357
    %462 = vmatprep.mubr.bf16.mxu0 %v193
    %463 = vmatmul.mubr.bf16.gmra.mrb[0].mxu0 %v192
    %v464 = vpop.f32.mrb[0].mxu0
    %v465 = vadd.f32 %v425, %v464
    %v466 = vpop.f32.mrb[0].mxu0
    %v467 = vpop.f32.mrb[0].mxu0
    %v468 = vpop.f32.mrb[0].mxu0
    %469 = vdwg.mxu0
    %v470 = vld [vmem:[%s4] sm:$0x1]
    %v472 = vlaneseq
    %v473 = vshrl.u32 %v472, 7
    %v474 = vsub.s32 0, %v473
    %v475 = vrot.slane %v470, %v474
    %v477 = vadd.f32 %v465, %v475
    %vm478 = vcmask 132096
    %v479 = vsel %vm478, %v477, -inf
    %480 = vmax.xlane.f32.xlu0 %v479
    %v481 = vpop.xlane.xlu0 %480
    %v482 = vsub.f32 %v477, %v481
    %v483 = vmul.f32 %v482, 1.442695
    %v484 = vpow.pop %v483
    %v485 = vsel %vm478, %v484, 0.0
    %486 = vadd.xlane.f32.xlu0 %v485
    %v487 = vpop.xlane.xlu0 %486
    %v488 = vrcp.pop %v487
    %v489 = vmul.f32 %v484, %v488
    %490 = vst.msk [vmem:[#allocation2] sm:$0x3] %vm478, %v489
    // Predicated region
    $region22: #{output_with_w_prepared.1} parent=1 // pred_check
      _
    $region23: #{output_with_w_prepared.1} parent=1 // pred_check_branch
      %492 = sbr.rel (0) target = $region25
    $region24: #{output_with_w_prepared.1} parent=1 // pred_region
      %s494 = ssub.s32 32, 32
      %495 = vsyncadd [#allocation3], %s494
      %s497 = sshll.u32 [#allocation2], 4
      %s498 = int_to_ptr.vmem [resolvable:$true] %s497
      %500 = dma.vmem_to_hbm [thread:$0]  %s498, 32, %s5, [#allocation3]
    $region25: #{output_with_w_prepared.1} parent=1 // pred_fallthru
      _
    // Predicated region
    $region26: #{output_with_w_prepared.1} parent=1 // pred_check
      _
    $region27: #{output_with_w_prepared.1} parent=1 // pred_check_branch
      %502 = sbr.rel (0) target = $region29
    $region28: #{output_with_w_prepared.1} parent=1 // pred_region
      %503 = dma.done [#allocation3], 32
    $region29: #{output_with_w_prepared.1} parent=1 // pred_fallthru
      _
    %504 = vsyncpa [#allocation3], 1

</llo_original>
